<compile_context>
chip_gen: v5e
topology: v5e:2x2
jax: 0.10.0
libtpu: 0.0.40
codegen_flags: <defaults>
</compile_context>

<pallas_src>
import functools

import jax
import jax.numpy as jnp
from jax.experimental import pallas as pl
from jax.experimental.pallas import tpu as pltpu


def mlp_kernel(x_ref,
               w1_ref, b1_ref,
               w2_ref, b2_ref,
               w3_ref, b3_ref,
               w4_ref, b4_ref,
               o_ref):
    # BN is already folded into the (bf16) weights / (f32) biases in the wrapper.
    h = x_ref[...].astype(jnp.bfloat16)

    z = jnp.dot(h, w1_ref[...], preferred_element_type=jnp.float32) + b1_ref[...]
    h = jnp.maximum(z, 0.0).astype(jnp.bfloat16)

    z = jnp.dot(h, w2_ref[...], preferred_element_type=jnp.float32) + b2_ref[...]
    h = jnp.maximum(z, 0.0).astype(jnp.bfloat16)

    z = jnp.dot(h, w3_ref[...], preferred_element_type=jnp.float32) + b3_ref[...]
    h = jnp.maximum(z, 0.0).astype(jnp.bfloat16)

    z = jnp.dot(h, w4_ref[...], preferred_element_type=jnp.float32) + b4_ref[...]
    # TODO(synk): if the 3-wide masked store ever becomes the binding slot, zero-pad
    # w4/b4 to N=128 (lane-dense vst) and slice [:, :3] outside the kernel.
    o_ref[...] = z.astype(o_ref.dtype)


def _fold_bn(gamma, beta, running_mean, running_var, eps=1e-5):
    scale = gamma / jnp.sqrt(running_var + eps)
    shift = beta - running_mean * scale
    return scale, shift


def _fold_params(params):
    """Fold the 4 eval-mode BN layers + torch biases into 4 (weight, bias) pairs.

    Weights are returned pre-cast to bf16 (MXU inputs); biases stay f32 and are
    added after the f32 accumulation.
    """
    s0, t0 = _fold_bn(*params["bn0"])
    s1, t1 = _fold_bn(*params["bn1"])
    s2, t2 = _fold_bn(*params["bn2"])
    s3, t3 = _fold_bn(*params["bn3"])

    w1 = params["w1"] * s0[:, None] * s1[None, :]
    b1 = (t0 @ params["w1"] + params["b1"]) * s1 + t1
    w2 = params["w2"] * s2[None, :]
    b2 = params["b2"] * s2 + t2
    w3 = params["w3"] * s3[None, :]
    b3 = params["b3"] * s3 + t3
    w4 = params["w4"]
    b4 = params["b4"]

    weights = [w.astype(jnp.bfloat16) for w in (w1, w2, w3, w4)]
    biases = [b.reshape(1, -1).astype(jnp.float32) for b in (b1, b2, b3, b4)]
    return weights, biases


def _round_up(n, m):
    return (n + m - 1) // m * m


@functools.partial(jax.jit, static_argnames=("tb",))
def mlp_forward(x, params, tb=512):
    """Fused MLPModel forward. x: [B, 8] f32 -> [B, 3] f32."""
    B, F = x.shape
    assert F == 8
    assert tb % 16 == 0  # bf16 sublane packing

    weights, biases = _fold_params(params)

    # Clamp the batch tile to the (16-aligned) batch, zero-pad the batch so the grid
    # evenly covers it, and slice the padded rows off afterwards.
    tb_eff = min(tb, _round_up(B, 16))
    Bp = _round_up(B, tb_eff)
    if Bp != B:
        x = jnp.pad(x, ((0, Bp - B), (0, 0)))
    grid = (Bp // tb_eff,)

    def full_spec(shape):
        return pl.BlockSpec(shape, lambda i: (0, 0))

    in_specs = [pl.BlockSpec((tb_eff, 8), lambda i: (i, 0))]
    for w, b in zip(weights, biases):
        in_specs.append(full_spec(w.shape))
        in_specs.append(full_spec(b.shape))

    out = pl.pallas_call(
        mlp_kernel,
        out_shape=jax.ShapeDtypeStruct((Bp, 3), jnp.float32),
        grid_spec=pltpu.PrefetchScalarGridSpec(
            num_scalar_prefetch=0,
            grid=grid,
            in_specs=in_specs,
            out_specs=pl.BlockSpec((tb_eff, 3), lambda i: (i, 0)),
        ),
        compiler_params=pltpu.CompilerParams(
            dimension_semantics=("parallel",)),
    )(x,
      weights[0], biases[0],
      weights[1], biases[1],
      weights[2], biases[2],
      weights[3], biases[3])

    return out[:B] if Bp != B else out


def init_params(key):
    dims = [(8, 256), (256, 128), (128, 16), (16, 3)]
    params = {}
    keys = jax.random.split(key, 24)
    ki = 0
    for li, (fan_in, fan_out) in enumerate(dims, start=1):
        bound = 1.0 / jnp.sqrt(fan_in)
        params[f"w{li}"] = jax.random.uniform(
            keys[ki], (fan_in, fan_out), jnp.float32, -bound, bound)
        ki += 1
        params[f"b{li}"] = jax.random.uniform(
            keys[ki], (fan_out,), jnp.float32, -bound, bound)
        ki += 1
    # BatchNorm1d params: (gamma, beta, running_mean, running_var)
    for name, feat in [("bn0", 8), ("bn1", 256), ("bn2", 128), ("bn3", 16)]:
        gamma = 1.0 + 0.1 * jax.random.normal(keys[ki], (feat,), jnp.float32)
        ki += 1
        beta = 0.1 * jax.random.normal(keys[ki], (feat,), jnp.float32)
        ki += 1
        running_mean = 0.1 * jax.random.normal(keys[ki], (feat,), jnp.float32)
        ki += 1
        running_var = jax.random.uniform(keys[ki], (feat,), jnp.float32, 0.5, 1.5)
        ki += 1
        params[name] = (gamma, beta, running_mean, running_var)
    return params


def reference_forward_f32(x, params):
    """Plain-JAX f32 reference matching the torch module in eval() mode."""
    def bn(h, p):
        s, t = _fold_bn(*p)
        return h * s + t
    h = bn(x, params["bn0"])
    h = jnp.maximum(bn(h @ params["w1"] + params["b1"], params["bn1"]), 0.0)
    h = jnp.maximum(bn(h @ params["w2"] + params["b2"], params["bn2"]), 0.0)
    h = jnp.maximum(bn(h @ params["w3"] + params["b3"], params["bn3"]), 0.0)
    return h @ params["w4"] + params["b4"]


def reference_forward_bf16(x, params):
    """Mirrors the kernel math exactly (folded BN, bf16 MXU inputs, f32 accumulation)."""
    weights, biases = _fold_params(params)
    h = x.astype(jnp.bfloat16)
    z = None
    for li, (w, b) in enumerate(zip(weights, biases)):
        z = jnp.dot(h, w, preferred_element_type=jnp.float32) + b
        if li < 3:
            h = jnp.maximum(z, 0.0).astype(jnp.bfloat16)
    return z


if __name__ == "__main__":
    key = jax.random.PRNGKey(0)
    pkey, xkey = jax.random.split(key)
    params = init_params(pkey)

    # Small, non-tile-aligned batch: exercises the zero-padding path and a 2-step grid.
    B = 200
    x = jax.random.normal(xkey, (B, 8), jnp.float32)

    out = mlp_forward(x, params, tb=128)
    out = jax.block_until_ready(out)
    assert out.shape == (B, 3)

    # Strict check against a plain-JAX path that uses the same bf16/f32 arithmetic.
    ref_bf16 = reference_forward_bf16(x, params)
    assert jnp.allclose(out, ref_bf16, atol=2e-3, rtol=2e-3), "mismatch vs bf16-path reference"

    # Looser sanity check against the pure-f32 eval-mode module semantics
    # (tolerance accounts for bf16 matmul inputs).
    ref_f32 = reference_forward_f32(x, params)
    assert jnp.allclose(out, ref_f32, atol=1e-1, rtol=1e-1), "mismatch vs f32 reference"

    print("KERNEL_OK")
</pallas_src>

<mosaic_0001>
module attributes {stable_mosaic.version = 11 : i64} {
  func.func @mlp_kernel(%arg0: i32, %arg1: memref<128x8xf32, #tpu.memory_space<vmem>>, %arg2: memref<8x256xbf16, #tpu.memory_space<vmem>>, %arg3: memref<1x256xf32, #tpu.memory_space<vmem>>, %arg4: memref<256x128xbf16, #tpu.memory_space<vmem>>, %arg5: memref<1x128xf32, #tpu.memory_space<vmem>>, %arg6: memref<128x16xbf16, #tpu.memory_space<vmem>>, %arg7: memref<1x16xf32, #tpu.memory_space<vmem>>, %arg8: memref<16x3xbf16, #tpu.memory_space<vmem>>, %arg9: memref<1x3xf32, #tpu.memory_space<vmem>>, %arg10: memref<128x3xf32, #tpu.memory_space<vmem>>) attributes {dimension_semantics = [#tpu.dimension_semantics<parallel>], iteration_bounds = array<i64: 2>, scalar_prefetch = 0 : i64, scratch_operands = 0 : i64, tpu.core_type = #tpu.core_type<tc>, window_params = [{transform_indices = @transform_0, window_bounds = array<i64: 128, 8>}, {pipeline_mode = #tpu.pipeline_mode<synchronous>, transform_indices = @transform_1, window_bounds = array<i64: 8, 256>}, {pipeline_mode = #tpu.pipeline_mode<synchronous>, transform_indices = @transform_2, window_bounds = array<i64: 1, 256>}, {pipeline_mode = #tpu.pipeline_mode<synchronous>, transform_indices = @transform_3, window_bounds = array<i64: 256, 128>}, {pipeline_mode = #tpu.pipeline_mode<synchronous>, transform_indices = @transform_4, window_bounds = array<i64: 1, 128>}, {pipeline_mode = #tpu.pipeline_mode<synchronous>, transform_indices = @transform_5, window_bounds = array<i64: 128, 16>}, {pipeline_mode = #tpu.pipeline_mode<synchronous>, transform_indices = @transform_6, window_bounds = array<i64: 1, 16>}, {pipeline_mode = #tpu.pipeline_mode<synchronous>, transform_indices = @transform_7, window_bounds = array<i64: 16, 3>}, {pipeline_mode = #tpu.pipeline_mode<synchronous>, transform_indices = @transform_8, window_bounds = array<i64: 1, 3>}, {transform_indices = @transform_9, window_bounds = array<i64: 128, 3>}]} {
    %c0 = arith.constant 0 : index
    %c0_0 = arith.constant 0 : index
    %0 = vector.load %arg1[%c0, %c0_0] : memref<128x8xf32, #tpu.memory_space<vmem>>, vector<128x8xf32>
    %1 = arith.truncf %0 : vector<128x8xf32> to vector<128x8xbf16>
    %c0_1 = arith.constant 0 : index
    %c0_2 = arith.constant 0 : index
    %2 = vector.load %arg2[%c0_1, %c0_2] : memref<8x256xbf16, #tpu.memory_space<vmem>>, vector<8x256xbf16>
    %cst = arith.constant dense<0.000000e+00> : vector<128x256xf32>
    %3 = tpu.matmul %1, %2, %cst {dimension_numbers = #tpu.dot_dimension_numbers<[1], [0], [0], [1], [0, 0, 1, 1], [], []>} : vector<128x8xbf16>, vector<8x256xbf16>, vector<128x256xf32> -> vector<128x256xf32>
    %c0_3 = arith.constant 0 : index
    %c0_4 = arith.constant 0 : index
    %4 = vector.load %arg3[%c0_3, %c0_4] : memref<1x256xf32, #tpu.memory_space<vmem>>, vector<1x256xf32>
    %5 = vector.broadcast %4 : vector<1x256xf32> to vector<128x256xf32>
    %6 = arith.addf %3, %5 : vector<128x256xf32>
    %cst_5 = arith.constant 0.000000e+00 : f32
    %7 = vector.broadcast %cst_5 : f32 to vector<128x256xf32>
    %8 = arith.maximumf %6, %7 : vector<128x256xf32>
    %9 = arith.truncf %8 : vector<128x256xf32> to vector<128x256xbf16>
    %c0_6 = arith.constant 0 : index
    %c0_7 = arith.constant 0 : index
    %10 = vector.load %arg4[%c0_6, %c0_7] : memref<256x128xbf16, #tpu.memory_space<vmem>>, vector<256x128xbf16>
    %cst_8 = arith.constant dense<0.000000e+00> : vector<128x128xf32>
    %11 = tpu.matmul %9, %10, %cst_8 {dimension_numbers = #tpu.dot_dimension_numbers<[1], [0], [0], [1], [0, 0, 1, 1], [], []>} : vector<128x256xbf16>, vector<256x128xbf16>, vector<128x128xf32> -> vector<128x128xf32>
    %c0_9 = arith.constant 0 : index
    %c0_10 = arith.constant 0 : index
    %12 = vector.load %arg5[%c0_9, %c0_10] : memref<1x128xf32, #tpu.memory_space<vmem>>, vector<1x128xf32>
    %13 = vector.broadcast %12 : vector<1x128xf32> to vector<128x128xf32>
    %14 = arith.addf %11, %13 : vector<128x128xf32>
    %cst_11 = arith.constant 0.000000e+00 : f32
    %15 = vector.broadcast %cst_11 : f32 to vector<128x128xf32>
    %16 = arith.maximumf %14, %15 : vector<128x128xf32>
    %17 = arith.truncf %16 : vector<128x128xf32> to vector<128x128xbf16>
    %c0_12 = arith.constant 0 : index
    %c0_13 = arith.constant 0 : index
    %18 = vector.load %arg6[%c0_12, %c0_13] : memref<128x16xbf16, #tpu.memory_space<vmem>>, vector<128x16xbf16>
    %cst_14 = arith.constant dense<0.000000e+00> : vector<128x16xf32>
    %19 = tpu.matmul %17, %18, %cst_14 {dimension_numbers = #tpu.dot_dimension_numbers<[1], [0], [0], [1], [0, 0, 1, 1], [], []>} : vector<128x128xbf16>, vector<128x16xbf16>, vector<128x16xf32> -> vector<128x16xf32>
    %c0_15 = arith.constant 0 : index
    %c0_16 = arith.constant 0 : index
    %20 = vector.load %arg7[%c0_15, %c0_16] : memref<1x16xf32, #tpu.memory_space<vmem>>, vector<1x16xf32>
    %21 = vector.broadcast %20 : vector<1x16xf32> to vector<128x16xf32>
    %22 = arith.addf %19, %21 : vector<128x16xf32>
    %cst_17 = arith.constant 0.000000e+00 : f32
    %23 = vector.broadcast %cst_17 : f32 to vector<128x16xf32>
    %24 = arith.maximumf %22, %23 : vector<128x16xf32>
    %25 = arith.truncf %24 : vector<128x16xf32> to vector<128x16xbf16>
    %c0_18 = arith.constant 0 : index
    %c0_19 = arith.constant 0 : index
    %26 = vector.load %arg8[%c0_18, %c0_19] : memref<16x3xbf16, #tpu.memory_space<vmem>>, vector<16x3xbf16>
    %cst_20 = arith.constant dense<0.000000e+00> : vector<128x3xf32>
    %27 = tpu.matmul %25, %26, %cst_20 {dimension_numbers = #tpu.dot_dimension_numbers<[1], [0], [0], [1], [0, 0, 1, 1], [], []>} : vector<128x16xbf16>, vector<16x3xbf16>, vector<128x3xf32> -> vector<128x3xf32>
    %c0_21 = arith.constant 0 : index
    %c0_22 = arith.constant 0 : index
    %28 = vector.load %arg9[%c0_21, %c0_22] : memref<1x3xf32, #tpu.memory_space<vmem>>, vector<1x3xf32>
    %29 = vector.broadcast %28 : vector<1x3xf32> to vector<128x3xf32>
    %30 = arith.addf %27, %29 : vector<128x3xf32>
    %c0_23 = arith.constant 0 : index
    %c0_24 = arith.constant 0 : index
    %31 = vector.load %arg10[%c0_23, %c0_24] : memref<128x3xf32, #tpu.memory_space<vmem>>, vector<128x3xf32>
    tpu.vector_store %arg10[%c0_23, %c0_24], %30 {strides = array<i32>} : memref<128x3xf32, #tpu.memory_space<vmem>>, vector<128x3xf32>,
    return
  }
  func.func @transform_0(%arg0: i32) -> (i32, i32) {
    %c0_i32 = arith.constant 0 : i32
    %c0_i32_0 = arith.constant 0 : i32
    return %arg0, %c0_i32 : i32, i32
  }
  func.func @transform_1(%arg0: i32) -> (i32, i32) {
    %c0_i32 = arith.constant 0 : i32
    %c0_i32_0 = arith.constant 0 : i32
    %c0_i32_1 = arith.constant 0 : i32
    return %c0_i32, %c0_i32_0 : i32, i32
  }
  func.func @transform_2(%arg0: i32) -> (i32, i32) {
    %c0_i32 = arith.constant 0 : i32
    %c0_i32_0 = arith.constant 0 : i32
    %c0_i32_1 = arith.constant 0 : i32
    return %c0_i32, %c0_i32_0 : i32, i32
  }
  func.func @transform_3(%arg0: i32) -> (i32, i32) {
    %c0_i32 = arith.constant 0 : i32
    %c0_i32_0 = arith.constant 0 : i32
    %c0_i32_1 = arith.constant 0 : i32
    return %c0_i32, %c0_i32_0 : i32, i32
  }
  func.func @transform_4(%arg0: i32) -> (i32, i32) {
    %c0_i32 = arith.constant 0 : i32
    %c0_i32_0 = arith.constant 0 : i32
    %c0_i32_1 = arith.constant 0 : i32
    return %c0_i32, %c0_i32_0 : i32, i32
  }
  func.func @transform_5(%arg0: i32) -> (i32, i32) {
    %c0_i32 = arith.constant 0 : i32
    %c0_i32_0 = arith.constant 0 : i32
    %c0_i32_1 = arith.constant 0 : i32
    return %c0_i32, %c0_i32_0 : i32, i32
  }
  func.func @transform_6(%arg0: i32) -> (i32, i32) {
    %c0_i32 = arith.constant 0 : i32
    %c0_i32_0 = arith.constant 0 : i32
    %c0_i32_1 = arith.constant 0 : i32
    return %c0_i32, %c0_i32_0 : i32, i32
  }
  func.func @transform_7(%arg0: i32) -> (i32, i32) {
    %c0_i32 = arith.constant 0 : i32
    %c0_i32_0 = arith.constant 0 : i32
    %c0_i32_1 = arith.constant 0 : i32
    return %c0_i32, %c0_i32_0 : i32, i32
  }
  func.func @transform_8(%arg0: i32) -> (i32, i32) {
    %c0_i32 = arith.constant 0 : i32
    %c0_i32_0 = arith.constant 0 : i32
    %c0_i32_1 = arith.constant 0 : i32
    return %c0_i32, %c0_i32_0 : i32, i32
  }
  func.func @transform_9(%arg0: i32) -> (i32, i32) {
    %c0_i32 = arith.constant 0 : i32
    %c0_i32_0 = arith.constant 0 : i32
    return %arg0, %c0_i32 : i32, i32
  }
}

</mosaic_0001>

<llo_original>
// kernel: mlp_forward.1
$region0: #{mlp_forward.1}
  #allocation0 [shape = 'u32[]', space=smem, size = 0x4, offset = 0x4, fixed_abs, tag = 'smem constant byte address 0x4 - core index']
  #allocation1 [shape = 'u32[72,128]{1,0:T(1,128)}', space=vmem, size = 0x9000, scoped, tag = 'internal scratch']
  %s0 = inlined_call_operand.vmem [shape: f32[256,8], index: 0, kind: input, shape index: {}]
  %s1 = inlined_call_operand.vmem [shape: bf16[8,256], index: 1, kind: input, shape index: {}]
  %s2 = inlined_call_operand.vmem [shape: f32[1,256], index: 2, kind: input, shape index: {}]
  %s3 = inlined_call_operand.vmem [shape: bf16[256,128], index: 3, kind: input, shape index: {}]
  %s4 = inlined_call_operand.vmem [shape: f32[1,128], index: 4, kind: input, shape index: {}]
  %s5 = inlined_call_operand.vmem [shape: bf16[128,16], index: 5, kind: input, shape index: {}]
  %s6 = inlined_call_operand.vmem [shape: f32[1,16], index: 6, kind: input, shape index: {}]
  %s7 = inlined_call_operand.vmem [shape: bf16[16,3], index: 7, kind: input, shape index: {}]
  %s8 = inlined_call_operand.vmem [shape: f32[1,3], index: 8, kind: input, shape index: {}]
  %s9 = inlined_call_operand.vmem [shape: f32[256,3], index: 9, kind: output, shape index: {}]
  %s10 = sld [smem:[#allocation0]]
  $region69: #{mlp_forward.1} parent=0
    _
  %s12 = ssub.s32 1, %s10
  %s13 = scalar_select 0, %s12, %s10
  loop: start=0, step=1, limit=4
  $region2: #{mlp_forward.1} parent=0 // loop_pre_header
    _
  $region3: #{mlp_forward.1} parent=0 // loop_header
    %s15 = sphi 0, %s19
    %p16 = scmp.ge.s32.totalorder %s15, 4
    %s25 = sphi 0, %s27
    %s28 = sphi 0, %s25
    %s29 = sphi 0, %s28
    %s45 = sphi 0, %s29
    %s49 = sphi 0, %s49
    %s51 = sphi 0, %s49
    %s52 = sphi 0, %s51
    %s66 = sphi 0, %s52
    %s70 = sphi 0, %s70
    %s72 = sphi 0, %s70
    %s73 = sphi 0, %s72
    %s87 = sphi 0, %s73
    %s91 = sphi 0, %s91
    %s93 = sphi 0, %s91
    %s94 = sphi 0, %s93
    %s108 = sphi 0, %s94
    %s112 = sphi 0, %s112
    %s114 = sphi 0, %s112
    %s115 = sphi 0, %s114
    %s129 = sphi 0, %s115
    %s133 = sphi 0, %s133
    %s135 = sphi 0, %s133
    %s136 = sphi 0, %s135
    %s150 = sphi 0, %s136
    %s154 = sphi 0, %s154
    %s156 = sphi 0, %s154
    %s157 = sphi 0, %s156
    %s171 = sphi 0, %s157
    %s175 = sphi 0, %s175
    %s177 = sphi 0, %s175
    %s178 = sphi 0, %s177
    %s192 = sphi 0, %s178
    %s196 = sphi 0, %s196
    %s198 = sphi 0, %s196
    %s199 = sphi 0, %s198
    %s213 = sphi 0, %s199
    %s219 = sphi 0, %s221
    %s222 = sphi 0, %s219
    %s223 = sphi 0, %s222
    %s239 = sphi 0, %s223
  $region4: #{mlp_forward.1} parent=0 // loop_header_branch
    %18 = sbr.rel (%p16) target = $region8
  $region5: #{mlp_forward.1} parent=0 // loop_body
    %s20 = ssub.s32 %s15, 1
    %s21 = ssub.s32 %s15, 2
    %s22 = sadd.s32 %s15, 1
    %s23 = ssub.s32 %s15, %s22
    %p24 = scmp.eq.s32.totalorder %s23, 0
    %s26 = sadd.s32 %s25, 1
    %s27 = scalar_select %p24, %s25, %s26
    %p30 = pneg %p24
    %p31 = scmp.eq.s32.totalorder %s15, 1
    %p32 = por %p30, %p31
    %p33 = scmp.ne.s32.totalorder %s25, %s28
    %p34 = scmp.eq.s32.totalorder %s15, 0
    %p35 = por %p33, %p34
    %p36 = scmp.ne.s32.totalorder %s25, %s28
    %p37 = scmp.eq.s32.totalorder %s20, 1
    %p38 = por %p36, %p37
    %p39 = scmp.ne.s32.totalorder %s28, %s29
    %p40 = scmp.eq.s32.totalorder %s20, 0
    %p41 = por %p39, %p40
    %p42 = scmp.ne.s32.totalorder %s28, %s29
    %p43 = scmp.eq.s32.totalorder %s21, 1
    %p44 = por %p42, %p43
    %p46 = scmp.ne.s32.totalorder %s29, %s45
    %p47 = scmp.eq.s32.totalorder %s21, 0
    %p48 = por %p46, %p47
    %s50 = sadd.s32 %s49, 1
    %p53 = scmp.eq.s32.totalorder %s15, 1
    %p54 = scmp.ne.s32.totalorder %s49, %s51
    %p55 = scmp.eq.s32.totalorder %s15, 0
    %p56 = por %p54, %p55
    %p57 = scmp.ne.s32.totalorder %s49, %s51
    %p58 = scmp.eq.s32.totalorder %s20, 1
    %p59 = por %p57, %p58
    %p60 = scmp.ne.s32.totalorder %s51, %s52
    %p61 = scmp.eq.s32.totalorder %s20, 0
    %p62 = por %p60, %p61
    %p63 = scmp.ne.s32.totalorder %s51, %s52
    %p64 = scmp.eq.s32.totalorder %s21, 1
    %p65 = por %p63, %p64
    %p67 = scmp.ne.s32.totalorder %s52, %s66
    %p68 = scmp.eq.s32.totalorder %s21, 0
    %p69 = por %p67, %p68
    %s71 = sadd.s32 %s70, 1
    %p74 = scmp.eq.s32.totalorder %s15, 1
    %p75 = scmp.ne.s32.totalorder %s70, %s72
    %p76 = scmp.eq.s32.totalorder %s15, 0
    %p77 = por %p75, %p76
    %p78 = scmp.ne.s32.totalorder %s70, %s72
    %p79 = scmp.eq.s32.totalorder %s20, 1
    %p80 = por %p78, %p79
    %p81 = scmp.ne.s32.totalorder %s72, %s73
    %p82 = scmp.eq.s32.totalorder %s20, 0
    %p83 = por %p81, %p82
    %p84 = scmp.ne.s32.totalorder %s72, %s73
    %p85 = scmp.eq.s32.totalorder %s21, 1
    %p86 = por %p84, %p85
    %p88 = scmp.ne.s32.totalorder %s73, %s87
    %p89 = scmp.eq.s32.totalorder %s21, 0
    %p90 = por %p88, %p89
    %s92 = sadd.s32 %s91, 1
    %p95 = scmp.eq.s32.totalorder %s15, 1
    %p96 = scmp.ne.s32.totalorder %s91, %s93
    %p97 = scmp.eq.s32.totalorder %s15, 0
    %p98 = por %p96, %p97
    %p99 = scmp.ne.s32.totalorder %s91, %s93
    %p100 = scmp.eq.s32.totalorder %s20, 1
    %p101 = por %p99, %p100
    %p102 = scmp.ne.s32.totalorder %s93, %s94
    %p103 = scmp.eq.s32.totalorder %s20, 0
    %p104 = por %p102, %p103
    %p105 = scmp.ne.s32.totalorder %s93, %s94
    %p106 = scmp.eq.s32.totalorder %s21, 1
    %p107 = por %p105, %p106
    %p109 = scmp.ne.s32.totalorder %s94, %s108
    %p110 = scmp.eq.s32.totalorder %s21, 0
    %p111 = por %p109, %p110
    %s113 = sadd.s32 %s112, 1
    %p116 = scmp.eq.s32.totalorder %s15, 1
    %p117 = scmp.ne.s32.totalorder %s112, %s114
    %p118 = scmp.eq.s32.totalorder %s15, 0
    %p119 = por %p117, %p118
    %p120 = scmp.ne.s32.totalorder %s112, %s114
    %p121 = scmp.eq.s32.totalorder %s20, 1
    %p122 = por %p120, %p121
    %p123 = scmp.ne.s32.totalorder %s114, %s115
    %p124 = scmp.eq.s32.totalorder %s20, 0
    %p125 = por %p123, %p124
    %p126 = scmp.ne.s32.totalorder %s114, %s115
    %p127 = scmp.eq.s32.totalorder %s21, 1
    %p128 = por %p126, %p127
    %p130 = scmp.ne.s32.totalorder %s115, %s129
    %p131 = scmp.eq.s32.totalorder %s21, 0
    %p132 = por %p130, %p131
    %s134 = sadd.s32 %s133, 1
    %p137 = scmp.eq.s32.totalorder %s15, 1
    %p138 = scmp.ne.s32.totalorder %s133, %s135
    %p139 = scmp.eq.s32.totalorder %s15, 0
    %p140 = por %p138, %p139
    %p141 = scmp.ne.s32.totalorder %s133, %s135
    %p142 = scmp.eq.s32.totalorder %s20, 1
    %p143 = por %p141, %p142
    %p144 = scmp.ne.s32.totalorder %s135, %s136
    %p145 = scmp.eq.s32.totalorder %s20, 0
    %p146 = por %p144, %p145
    %p147 = scmp.ne.s32.totalorder %s135, %s136
    %p148 = scmp.eq.s32.totalorder %s21, 1
    %p149 = por %p147, %p148
    %p151 = scmp.ne.s32.totalorder %s136, %s150
    %p152 = scmp.eq.s32.totalorder %s21, 0
    %p153 = por %p151, %p152
    %s155 = sadd.s32 %s154, 1
    %p158 = scmp.eq.s32.totalorder %s15, 1
    %p159 = scmp.ne.s32.totalorder %s154, %s156
    %p160 = scmp.eq.s32.totalorder %s15, 0
    %p161 = por %p159, %p160
    %p162 = scmp.ne.s32.totalorder %s154, %s156
    %p163 = scmp.eq.s32.totalorder %s20, 1
    %p164 = por %p162, %p163
    %p165 = scmp.ne.s32.totalorder %s156, %s157
    %p166 = scmp.eq.s32.totalorder %s20, 0
    %p167 = por %p165, %p166
    %p168 = scmp.ne.s32.totalorder %s156, %s157
    %p169 = scmp.eq.s32.totalorder %s21, 1
    %p170 = por %p168, %p169
    %p172 = scmp.ne.s32.totalorder %s157, %s171
    %p173 = scmp.eq.s32.totalorder %s21, 0
    %p174 = por %p172, %p173
    %s176 = sadd.s32 %s175, 1
    %p179 = scmp.eq.s32.totalorder %s15, 1
    %p180 = scmp.ne.s32.totalorder %s175, %s177
    %p181 = scmp.eq.s32.totalorder %s15, 0
    %p182 = por %p180, %p181
    %p183 = scmp.ne.s32.totalorder %s175, %s177
    %p184 = scmp.eq.s32.totalorder %s20, 1
    %p185 = por %p183, %p184
    %p186 = scmp.ne.s32.totalorder %s177, %s178
    %p187 = scmp.eq.s32.totalorder %s20, 0
    %p188 = por %p186, %p187
    %p189 = scmp.ne.s32.totalorder %s177, %s178
    %p190 = scmp.eq.s32.totalorder %s21, 1
    %p191 = por %p189, %p190
    %p193 = scmp.ne.s32.totalorder %s178, %s192
    %p194 = scmp.eq.s32.totalorder %s21, 0
    %p195 = por %p193, %p194
    %s197 = sadd.s32 %s196, 1
    %p200 = scmp.eq.s32.totalorder %s15, 1
    %p201 = scmp.ne.s32.totalorder %s196, %s198
    %p202 = scmp.eq.s32.totalorder %s15, 0
    %p203 = por %p201, %p202
    %p204 = scmp.ne.s32.totalorder %s196, %s198
    %p205 = scmp.eq.s32.totalorder %s20, 1
    %p206 = por %p204, %p205
    %p207 = scmp.ne.s32.totalorder %s198, %s199
    %p208 = scmp.eq.s32.totalorder %s20, 0
    %p209 = por %p207, %p208
    %p210 = scmp.ne.s32.totalorder %s198, %s199
    %p211 = scmp.eq.s32.totalorder %s21, 1
    %p212 = por %p210, %p211
    %p214 = scmp.ne.s32.totalorder %s199, %s213
    %p215 = scmp.eq.s32.totalorder %s21, 0
    %p216 = por %p214, %p215
    %s217 = ssub.s32 %s15, %s22
    %p218 = scmp.eq.s32.totalorder %s217, 0
    %s220 = sadd.s32 %s219, 1
    %s221 = scalar_select %p218, %s219, %s220
    %p224 = pneg %p218
    %p225 = scmp.eq.s32.totalorder %s15, 1
    %p226 = por %p224, %p225
    %p227 = scmp.ne.s32.totalorder %s219, %s222
    %p228 = scmp.eq.s32.totalorder %s15, 0
    %p229 = por %p227, %p228
    %p230 = scmp.ne.s32.totalorder %s219, %s222
    %p231 = scmp.eq.s32.totalorder %s20, 1
    %p232 = por %p230, %p231
    %p233 = scmp.ne.s32.totalorder %s222, %s223
    %p234 = scmp.eq.s32.totalorder %s20, 0
    %p235 = por %p233, %p234
    %p236 = scmp.ne.s32.totalorder %s222, %s223
    %p237 = scmp.eq.s32.totalorder %s21, 1
    %p238 = por %p236, %p237
    %p240 = scmp.ne.s32.totalorder %s223, %s239
    %p241 = scmp.eq.s32.totalorder %s21, 0
    %p242 = por %p240, %p241
    %p243 = scmp.le.s32.totalorder 1, %s15
    %p244 = scmp.lt.s32.totalorder %s15, 3
    %p245 = pnand %p243, %p244
    %p246 = pneg %p245
    // Predicated region
    $region9: #{mlp_forward.1} parent=5 // pred_check
      _
    $region10: #{mlp_forward.1} parent=5 // pred_check_branch
      %248 = sbr.rel (%p245) target = $region12
    $region11: #{mlp_forward.1} parent=5 // pred_region
      %s249 = ssub.s32 %s15, 1
      // Predicated region
      $region13: #{mlp_forward.1} parent=11 // pred_check
        %p250 = pneg %p62
      $region14: #{mlp_forward.1} parent=11 // pred_check_branch
        %252 = sbr.rel (%p250) target = $region16
      $region15: #{mlp_forward.1} parent=11 // pred_region
        _
      $region16: #{mlp_forward.1} parent=11 // pred_fallthru
        _
      // Predicated region
      $region17: #{mlp_forward.1} parent=11 // pred_check
        %p253 = pneg %p83
      $region18: #{mlp_forward.1} parent=11 // pred_check_branch
        %255 = sbr.rel (%p253) target = $region20
      $region19: #{mlp_forward.1} parent=11 // pred_region
        _
      $region20: #{mlp_forward.1} parent=11 // pred_fallthru
        _
      // Predicated region
      $region21: #{mlp_forward.1} parent=11 // pred_check
        %p256 = pneg %p104
      $region22: #{mlp_forward.1} parent=11 // pred_check_branch
        %258 = sbr.rel (%p256) target = $region24
      $region23: #{mlp_forward.1} parent=11 // pred_region
        _
      $region24: #{mlp_forward.1} parent=11 // pred_fallthru
        _
      // Predicated region
      $region25: #{mlp_forward.1} parent=11 // pred_check
        %p259 = pneg %p125
      $region26: #{mlp_forward.1} parent=11 // pred_check_branch
        %261 = sbr.rel (%p259) target = $region28
      $region27: #{mlp_forward.1} parent=11 // pred_region
        _
      $region28: #{mlp_forward.1} parent=11 // pred_fallthru
        _
      // Predicated region
      $region29: #{mlp_forward.1} parent=11 // pred_check
        %p262 = pneg %p146
      $region30: #{mlp_forward.1} parent=11 // pred_check_branch
        %264 = sbr.rel (%p262) target = $region32
      $region31: #{mlp_forward.1} parent=11 // pred_region
        _
      $region32: #{mlp_forward.1} parent=11 // pred_fallthru
        _
      // Predicated region
      $region33: #{mlp_forward.1} parent=11 // pred_check
        %p265 = pneg %p167
      $region34: #{mlp_forward.1} parent=11 // pred_check_branch
        %267 = sbr.rel (%p265) target = $region36
      $region35: #{mlp_forward.1} parent=11 // pred_region
        _
      $region36: #{mlp_forward.1} parent=11 // pred_fallthru
        _
      // Predicated region
      $region37: #{mlp_forward.1} parent=11 // pred_check
        %p268 = pneg %p188
      $region38: #{mlp_forward.1} parent=11 // pred_check_branch
        %270 = sbr.rel (%p268) target = $region40
      $region39: #{mlp_forward.1} parent=11 // pred_region
        _
      $region40: #{mlp_forward.1} parent=11 // pred_fallthru
        _
      // Predicated region
      $region41: #{mlp_forward.1} parent=11 // pred_check
        %p271 = pneg %p209
      $region42: #{mlp_forward.1} parent=11 // pred_check_branch
        %273 = sbr.rel (%p271) target = $region44
      $region43: #{mlp_forward.1} parent=11 // pred_region
        _
      $region44: #{mlp_forward.1} parent=11 // pred_fallthru
        _
    $region12: #{mlp_forward.1} parent=5 // pred_fallthru
      _
    %p274 = scmp.lt.s32.totalorder %s15, 2
    // Predicated region
    $region45: #{mlp_forward.1} parent=5 // pred_check
      %p275 = pneg %p274
    $region46: #{mlp_forward.1} parent=5 // pred_check_branch
      %277 = sbr.rel (%p275) target = $region48
    $region47: #{mlp_forward.1} parent=5 // pred_region
      // Predicated region
      $region49: #{mlp_forward.1} parent=47 // pred_check
        %p278 = pneg %p35
      $region50: #{mlp_forward.1} parent=47 // pred_check_branch
        %280 = sbr.rel (%p278) target = $region52
      $region51: #{mlp_forward.1} parent=47 // pred_region
        %s281 = smul.u32 16, %s15
        %p282 = scmp.lt.s32.totalorder %s281, 31
        %s283 = scalar_select %p282, %s281, 31
        %s284 = smul.addr %s283, 8
        %s285 = scalar_lea.vmem %s0, %s284
        %s286 = smul.u32 16, %s15
      $region52: #{mlp_forward.1} parent=47 // pred_fallthru
        _
    $region48: #{mlp_forward.1} parent=5 // pred_fallthru
      _
    %p287 = scmp.le.s32.totalorder 1, %s15
    %p288 = scmp.lt.s32.totalorder %s15, 3
    %p289 = pnand %p287, %p288
    %p290 = pneg %p289
    // Predicated region
    $region53: #{mlp_forward.1} parent=5 // pred_check
      _
    $region54: #{mlp_forward.1} parent=5 // pred_check_branch
      %292 = sbr.rel (%p289) target = $region56
    $region55: #{mlp_forward.1} parent=5 // pred_region
      %s293 = ssub.s32 %s15, 1
      %s294 = smul.u32 16, %s20
      %p295 = scmp.lt.s32.totalorder %s294, 31
      %s296 = scalar_select %p295, %s294, 31
      %s297 = smul.addr %s296, 8
      %s298 = scalar_lea.vmem %s0, %s297
      %p299 = pneg %p41
      %p300 = pneg %p38
      %p301 = pneg %p62
      %p302 = pneg %p59
      %p303 = pneg %p83
      %p304 = pneg %p80
      %p305 = pneg %p104
      %p306 = pneg %p101
      %p307 = pneg %p125
      %p308 = pneg %p122
      %p309 = pneg %p146
      %p310 = pneg %p143
      %p311 = pneg %p167
      %p312 = pneg %p164
      %p313 = pneg %p188
      %p314 = pneg %p185
      %p315 = pneg %p209
      %p316 = pneg %p206
      %p317 = pneg %p235
      %p318 = pneg %p232
      %s319 = smul.u32 16, %s20
      %p320 = scmp.lt.s32.totalorder %s319, 31
      %s321 = scalar_select %p320, %s319, 31
      %s322 = smul.addr %s321, 8
      %s323 = scalar_lea.vmem %s9, %s322
      %s324 = smul.u32 16, %s20
      %p325 = scmp.lt.s32.totalorder %s324, 31
      %s326 = scalar_select %p325, %s324, 31
      %s327 = smul.addr %s326, 8
      %s328 = scalar_lea.vmem %s0, %s327
      %s329 = smul.u32 16, %s20
      %s330 = smul.u32 16, %s20
      %p331 = scmp.lt.s32.totalorder %s330, 31
      %s332 = scalar_select %p331, %s330, 31
      %s333 = smul.addr %s332, 8
      %s334 = scalar_lea.vmem %s9, %s333
      %s335 = smul.u32 16, %s20
      %v337 = vld [vmem:[%s328] sm:$0xff]
      %v338 = vld [vmem:[%s328 + $0x8] sm:$0xff]
      %v339 = vld [vmem:[%s328 + $0x10] sm:$0xff]
      %v340 = vld [vmem:[%s328 + $0x18] sm:$0xff]
      %v341 = vld [vmem:[%s328 + $0x20] sm:$0xff]
      %v342 = vld [vmem:[%s328 + $0x28] sm:$0xff]
      %v343 = vld [vmem:[%s328 + $0x30] sm:$0xff]
      %v344 = vld [vmem:[%s328 + $0x38] sm:$0xff]
      %v345 = vld [vmem:[%s328 + $0x40] sm:$0xff]
      %v346 = vld [vmem:[%s328 + $0x48] sm:$0xff]
      %v347 = vld [vmem:[%s328 + $0x50] sm:$0xff]
      %v348 = vld [vmem:[%s328 + $0x58] sm:$0xff]
      %v349 = vld [vmem:[%s328 + $0x60] sm:$0xff]
      %v350 = vld [vmem:[%s328 + $0x68] sm:$0xff]
      %v351 = vld [vmem:[%s328 + $0x70] sm:$0xff]
      %v352 = vld [vmem:[%s328 + $0x78] sm:$0xff]
      %v353 = vpack.c.bf16 %v338, %v337
      %v354 = vpack.c.bf16 %v340, %v339
      %v355 = vpack.c.bf16 %v342, %v341
      %v356 = vpack.c.bf16 %v344, %v343
      %v357 = vpack.c.bf16 %v346, %v345
      %v358 = vpack.c.bf16 %v348, %v347
      %v359 = vpack.c.bf16 %v350, %v349
      %v360 = vpack.c.bf16 %v352, %v351
      %v361 = vld [vmem:[%s1] sm:$0xff]
      %v362 = vld [vmem:[%s2] sm:$0x3]
      %v364 = vperm.slane %v362, 0
      %v365 = vperm.slane %v362, 1
      %v369 = vunpack.c.l.b16 %v361
      %v370 = vunpack.c.h.b16 %v361
      %v371 = vpack.c.b16 %v369, %v369
      %v372 = vpack.c.b16 %v370, %v370
      %vm373 = vcmask 64512
      %v375 = vsel %vm373, %v353, 0
      %v378 = vsel %vm373, %v354, 0
      %v381 = vsel %vm373, %v355, 0
      %v384 = vsel %vm373, %v356, 0
      %v387 = vsel %vm373, %v357, 0
      %v390 = vsel %vm373, %v358, 0
      %v393 = vsel %vm373, %v359, 0
      %v396 = vsel %vm373, %v360, 0
      %vm398 = vcmask 1043456
      %v400 = vsel %vm398, %v371, 0
      %v403 = vsel %vm398, %v372, 0
      %405 = vmatpush.bf16.msra.mxu0 0
      %406 = vmatpush.bf16.msra.mxu0 0
      %407 = vmatpush.bf16.msra.mxu0 0
      %408 = vmatpush.bf16.msra.mxu0 0
      %409 = vmatpush.bf16.msra.mxu0 0
      %410 = vmatpush.bf16.msra.mxu0 0
      %411 = vmatpush.bf16.msra.mxu0 0
      %412 = vmatpush.bf16.msra.mxu0 %v400
      %413 = vmatmul.bf16.gmra.mxu0 %v375
      %v414 = vpop.f32.mrf.mxu0
      %v415 = vadd.f32 %v364, %v414
      %v416 = vpop.f32.mrf.mxu0
      %v417 = vadd.f32 %v364, %v416
      %418 = vmatmul.bf16.gmra.mxu0 %v378
      %v419 = vpop.f32.mrf.mxu0
      %v420 = vadd.f32 %v364, %v419
      %v421 = vpop.f32.mrf.mxu0
      %v422 = vadd.f32 %v364, %v421
      %423 = vmatmul.bf16.gmra.mxu0 %v381
      %v424 = vpop.f32.mrf.mxu0
      %v425 = vadd.f32 %v364, %v424
      %v426 = vpop.f32.mrf.mxu0
      %v427 = vadd.f32 %v364, %v426
      %428 = vmatmul.bf16.gmra.mxu0 %v384
      %v429 = vpop.f32.mrf.mxu0
      %v430 = vadd.f32 %v364, %v429
      %v431 = vpop.f32.mrf.mxu0
      %v432 = vadd.f32 %v364, %v431
      %433 = vmatmul.bf16.gmra.mxu0 %v387
      %v434 = vpop.f32.mrf.mxu0
      %v435 = vadd.f32 %v364, %v434
      %v436 = vpop.f32.mrf.mxu0
      %v437 = vadd.f32 %v364, %v436
      %438 = vmatmul.bf16.gmra.mxu0 %v390
      %v439 = vpop.f32.mrf.mxu0
      %v440 = vadd.f32 %v364, %v439
      %v441 = vpop.f32.mrf.mxu0
      %v442 = vadd.f32 %v364, %v441
      %443 = vmatmul.bf16.gmra.mxu0 %v393
      %v444 = vpop.f32.mrf.mxu0
      %v445 = vadd.f32 %v364, %v444
      %v446 = vpop.f32.mrf.mxu0
      %v447 = vadd.f32 %v364, %v446
      %448 = vmatmul.bf16.gmra.mxu0 %v396
      %v449 = vpop.f32.mrf.mxu0
      %v450 = vadd.f32 %v364, %v449
      %v451 = vpop.f32.mrf.mxu0
      %v452 = vadd.f32 %v364, %v451
      %453 = vdwg.mxu0
      %454 = vmatpush.bf16.msra.mxu0 0
      %455 = vmatpush.bf16.msra.mxu0 0
      %456 = vmatpush.bf16.msra.mxu0 0
      %457 = vmatpush.bf16.msra.mxu0 0
      %458 = vmatpush.bf16.msra.mxu0 0
      %459 = vmatpush.bf16.msra.mxu0 0
      %460 = vmatpush.bf16.msra.mxu0 0
      %461 = vmatpush.bf16.msra.mxu0 %v403
      %462 = vmatmul.bf16.gmra.mxu0 %v375
      %v463 = vpop.f32.mrf.mxu0
      %v464 = vadd.f32 %v365, %v463
      %v465 = vpop.f32.mrf.mxu0
      %v466 = vadd.f32 %v365, %v465
      %467 = vmatmul.bf16.gmra.mxu0 %v378
      %v468 = vpop.f32.mrf.mxu0
      %v469 = vadd.f32 %v365, %v468
      %v470 = vpop.f32.mrf.mxu0
      %v471 = vadd.f32 %v365, %v470
      %472 = vmatmul.bf16.gmra.mxu0 %v381
      %v473 = vpop.f32.mrf.mxu0
      %v474 = vadd.f32 %v365, %v473
      %v475 = vpop.f32.mrf.mxu0
      %v476 = vadd.f32 %v365, %v475
      %477 = vmatmul.bf16.gmra.mxu0 %v384
      %v478 = vpop.f32.mrf.mxu0
      %v479 = vadd.f32 %v365, %v478
      %v480 = vpop.f32.mrf.mxu0
      %v481 = vadd.f32 %v365, %v480
      %482 = vmatmul.bf16.gmra.mxu0 %v387
      %v483 = vpop.f32.mrf.mxu0
      %v484 = vadd.f32 %v365, %v483
      %v485 = vpop.f32.mrf.mxu0
      %v486 = vadd.f32 %v365, %v485
      %487 = vmatmul.bf16.gmra.mxu0 %v390
      %v488 = vpop.f32.mrf.mxu0
      %v489 = vadd.f32 %v365, %v488
      %v490 = vpop.f32.mrf.mxu0
      %v491 = vadd.f32 %v365, %v490
      %492 = vmatmul.bf16.gmra.mxu0 %v393
      %v493 = vpop.f32.mrf.mxu0
      %v494 = vadd.f32 %v365, %v493
      %v495 = vpop.f32.mrf.mxu0
      %v496 = vadd.f32 %v365, %v495
      %497 = vmatmul.bf16.gmra.mxu0 %v396
      %v498 = vpop.f32.mrf.mxu0
      %v499 = vadd.f32 %v365, %v498
      %v500 = vpop.f32.mrf.mxu0
      %v501 = vadd.f32 %v365, %v500
      %502 = vdwg.mxu0
      %v503 = vmax.f32 %v415, 0.0
      %v504 = vmax.f32 %v464, 0.0
      %v505 = vmax.f32 %v417, 0.0
      %v506 = vmax.f32 %v466, 0.0
      %v507 = vmax.f32 %v420, 0.0
      %v508 = vmax.f32 %v469, 0.0
      %v509 = vmax.f32 %v422, 0.0
      %v510 = vmax.f32 %v471, 0.0
      %v511 = vmax.f32 %v425, 0.0
      %v512 = vmax.f32 %v474, 0.0
      %v513 = vmax.f32 %v427, 0.0
      %v514 = vmax.f32 %v476, 0.0
      %v515 = vmax.f32 %v430, 0.0
      %v516 = vmax.f32 %v479, 0.0
      %v517 = vmax.f32 %v432, 0.0
      %v518 = vmax.f32 %v481, 0.0
      %v519 = vmax.f32 %v435, 0.0
      %v520 = vmax.f32 %v484, 0.0
      %v521 = vmax.f32 %v437, 0.0
      %v522 = vmax.f32 %v486, 0.0
      %v523 = vmax.f32 %v440, 0.0
      %v524 = vmax.f32 %v489, 0.0
      %v525 = vmax.f32 %v442, 0.0
      %v526 = vmax.f32 %v491, 0.0
      %v527 = vmax.f32 %v445, 0.0
      %v528 = vmax.f32 %v494, 0.0
      %v529 = vmax.f32 %v447, 0.0
      %v530 = vmax.f32 %v496, 0.0
      %v531 = vmax.f32 %v450, 0.0
      %v532 = vmax.f32 %v499, 0.0
      %v533 = vmax.f32 %v452, 0.0
      %v534 = vmax.f32 %v501, 0.0
      %v535 = vpack.c.bf16 %v505, %v503
      %v536 = vpack.c.bf16 %v506, %v504
      %v537 = vpack.c.bf16 %v509, %v507
      %v538 = vpack.c.bf16 %v510, %v508
      %v539 = vpack.c.bf16 %v513, %v511
      %v540 = vpack.c.bf16 %v514, %v512
      %v541 = vpack.c.bf16 %v517, %v515
      %v542 = vpack.c.bf16 %v518, %v516
      %v543 = vpack.c.bf16 %v521, %v519
      %v544 = vpack.c.bf16 %v522, %v520
      %v545 = vpack.c.bf16 %v525, %v523
      %v546 = vpack.c.bf16 %v526, %v524
      %v547 = vpack.c.bf16 %v529, %v527
      %v548 = vpack.c.bf16 %v530, %v528
      %v549 = vpack.c.bf16 %v533, %v531
      %v550 = vpack.c.bf16 %v534, %v532
      %v551 = vld [vmem:[%s3] sm:$0xf]
      %v552 = vld [vmem:[%s3 + $0x4] sm:$0xf]
      %v553 = vld [vmem:[%s3 + $0x8] sm:$0xf]
      %v554 = vld [vmem:[%s3 + $0xc] sm:$0xf]
      %v555 = vld [vmem:[%s3 + $0x10] sm:$0xf]
      %v556 = vld [vmem:[%s3 + $0x14] sm:$0xf]
      %v557 = vld [vmem:[%s3 + $0x18] sm:$0xf]
      %v558 = vld [vmem:[%s3 + $0x1c] sm:$0xf]
      %v559 = vld [vmem:[%s3 + $0x20] sm:$0xf]
      %v560 = vld [vmem:[%s3 + $0x24] sm:$0xf]
      %v561 = vld [vmem:[%s3 + $0x28] sm:$0xf]
      %v562 = vld [vmem:[%s3 + $0x2c] sm:$0xf]
      %v563 = vld [vmem:[%s3 + $0x30] sm:$0xf]
      %v564 = vld [vmem:[%s3 + $0x34] sm:$0xf]
      %v565 = vld [vmem:[%s3 + $0x38] sm:$0xf]
      %v566 = vld [vmem:[%s3 + $0x3c] sm:$0xf]
      %v567 = vld [vmem:[%s3 + $0x40] sm:$0xf]
      %v568 = vld [vmem:[%s3 + $0x44] sm:$0xf]
      %v569 = vld [vmem:[%s3 + $0x48] sm:$0xf]
      %v570 = vld [vmem:[%s3 + $0x4c] sm:$0xf]
      %v571 = vld [vmem:[%s3 + $0x50] sm:$0xf]
      %v572 = vld [vmem:[%s3 + $0x54] sm:$0xf]
      %v573 = vld [vmem:[%s3 + $0x58] sm:$0xf]
      %v574 = vld [vmem:[%s3 + $0x5c] sm:$0xf]
      %v575 = vld [vmem:[%s3 + $0x60] sm:$0xf]
      %v576 = vld [vmem:[%s3 + $0x64] sm:$0xf]
      %v577 = vld [vmem:[%s3 + $0x68] sm:$0xf]
      %v578 = vld [vmem:[%s3 + $0x6c] sm:$0xf]
      %v579 = vld [vmem:[%s3 + $0x70] sm:$0xf]
      %v580 = vld [vmem:[%s3 + $0x74] sm:$0xf]
      %v581 = vld [vmem:[%s3 + $0x78] sm:$0xf]
      %v582 = vld [vmem:[%s3 + $0x7c] sm:$0xf]
      %v583 = vld [vmem:[%s4] sm:$0x1]
      %v585 = vperm.slane %v583, 0
      %v619 = vunpack.c.l.b16 %v551
      %v620 = vunpack.c.l.b16 %v552
      %v621 = vunpack.c.l.b16 %v553
      %v622 = vunpack.c.l.b16 %v554
      %v623 = vunpack.c.l.b16 %v555
      %v624 = vunpack.c.l.b16 %v556
      %v625 = vunpack.c.l.b16 %v557
      %v626 = vunpack.c.l.b16 %v558
      %v627 = vunpack.c.l.b16 %v559
      %v628 = vunpack.c.l.b16 %v560
      %v629 = vunpack.c.l.b16 %v561
      %v630 = vunpack.c.l.b16 %v562
      %v631 = vunpack.c.l.b16 %v563
      %v632 = vunpack.c.l.b16 %v564
      %v633 = vunpack.c.l.b16 %v565
      %v634 = vunpack.c.l.b16 %v566
      %v635 = vunpack.c.l.b16 %v567
      %v636 = vunpack.c.l.b16 %v568
      %v637 = vunpack.c.l.b16 %v569
      %v638 = vunpack.c.l.b16 %v570
      %v639 = vunpack.c.l.b16 %v571
      %v640 = vunpack.c.l.b16 %v572
      %v641 = vunpack.c.l.b16 %v573
      %v642 = vunpack.c.l.b16 %v574
      %v643 = vunpack.c.l.b16 %v575
      %v644 = vunpack.c.l.b16 %v576
      %v645 = vunpack.c.l.b16 %v577
      %v646 = vunpack.c.l.b16 %v578
      %v647 = vunpack.c.l.b16 %v579
      %v648 = vunpack.c.l.b16 %v580
      %v649 = vunpack.c.l.b16 %v581
      %v650 = vunpack.c.l.b16 %v582
      %v651 = vpack.c.b16 %v620, %v619
      %v652 = vpack.c.b16 %v622, %v621
      %v653 = vpack.c.b16 %v624, %v623
      %v654 = vpack.c.b16 %v626, %v625
      %v655 = vpack.c.b16 %v628, %v627
      %v656 = vpack.c.b16 %v630, %v629
      %v657 = vpack.c.b16 %v632, %v631
      %v658 = vpack.c.b16 %v634, %v633
      %v659 = vpack.c.b16 %v636, %v635
      %v660 = vpack.c.b16 %v638, %v637
      %v661 = vpack.c.b16 %v640, %v639
      %v662 = vpack.c.b16 %v642, %v641
      %v663 = vpack.c.b16 %v644, %v643
      %v664 = vpack.c.b16 %v646, %v645
      %v665 = vpack.c.b16 %v648, %v647
      %v666 = vpack.c.b16 %v650, %v649
      %683 = vmatpush.bf16.msra.mxu0 %v658
      %684 = vmatpush.bf16.msra.mxu0 %v657
      %685 = vmatpush.bf16.msra.mxu0 %v656
      %686 = vmatpush.bf16.msra.mxu0 %v655
      %687 = vmatpush.bf16.msra.mxu0 %v654
      %688 = vmatpush.bf16.msra.mxu0 %v653
      %689 = vmatpush.bf16.msra.mxu0 %v652
      %690 = vmatpush.bf16.msra.mxu0 %v651
      %691 = vmatmul.bf16.gmra.mxu0 %v535
      %v692 = vpop.f32.mrf.mxu0
      %v693 = vadd.f32 %v585, %v692
      %v694 = vpop.f32.mrf.mxu0
      %v695 = vadd.f32 %v585, %v694
      %696 = vmatmul.bf16.gmra.mxu0 %v537
      %v697 = vpop.f32.mrf.mxu0
      %v698 = vadd.f32 %v585, %v697
      %v699 = vpop.f32.mrf.mxu0
      %v700 = vadd.f32 %v585, %v699
      %701 = vmatmul.bf16.gmra.mxu0 %v539
      %v702 = vpop.f32.mrf.mxu0
      %v703 = vadd.f32 %v585, %v702
      %v704 = vpop.f32.mrf.mxu0
      %v705 = vadd.f32 %v585, %v704
      %706 = vmatmul.bf16.gmra.mxu0 %v541
      %v707 = vpop.f32.mrf.mxu0
      %v708 = vadd.f32 %v585, %v707
      %v709 = vpop.f32.mrf.mxu0
      %v710 = vadd.f32 %v585, %v709
      %711 = vmatmul.bf16.gmra.mxu0 %v543
      %v712 = vpop.f32.mrf.mxu0
      %v713 = vadd.f32 %v585, %v712
      %v714 = vpop.f32.mrf.mxu0
      %v715 = vadd.f32 %v585, %v714
      %716 = vmatmul.bf16.gmra.mxu0 %v545
      %v717 = vpop.f32.mrf.mxu0
      %v718 = vadd.f32 %v585, %v717
      %v719 = vpop.f32.mrf.mxu0
      %v720 = vadd.f32 %v585, %v719
      %721 = vmatmul.bf16.gmra.mxu0 %v547
      %v722 = vpop.f32.mrf.mxu0
      %v723 = vadd.f32 %v585, %v722
      %v724 = vpop.f32.mrf.mxu0
      %v725 = vadd.f32 %v585, %v724
      %726 = vmatmul.bf16.gmra.mxu0 %v549
      %v727 = vpop.f32.mrf.mxu0
      %v728 = vadd.f32 %v585, %v727
      %v729 = vpop.f32.mrf.mxu0
      %v730 = vadd.f32 %v585, %v729
      %731 = vdwg.mxu0
      %732 = vmatpush.bf16.msra.mxu0 %v666
      %733 = vmatpush.bf16.msra.mxu0 %v665
      %734 = vmatpush.bf16.msra.mxu0 %v664
      %735 = vmatpush.bf16.msra.mxu0 %v663
      %736 = vmatpush.bf16.msra.mxu0 %v662
      %737 = vmatpush.bf16.msra.mxu0 %v661
      %738 = vmatpush.bf16.msra.mxu0 %v660
      %739 = vmatpush.bf16.msra.mxu0 %v659
      %740 = vmatmul.bf16.gmra.mxu0 %v536
      %v741 = vpop.f32.mrf.mxu0
      %v742 = vadd.f32 %v693, %v741
      %v743 = vpop.f32.mrf.mxu0
      %v744 = vadd.f32 %v695, %v743
      %745 = vmatmul.bf16.gmra.mxu0 %v538
      %v746 = vpop.f32.mrf.mxu0
      %v747 = vadd.f32 %v698, %v746
      %v748 = vpop.f32.mrf.mxu0
      %v749 = vadd.f32 %v700, %v748
      %750 = vmatmul.bf16.gmra.mxu0 %v540
      %v751 = vpop.f32.mrf.mxu0
      %v752 = vadd.f32 %v703, %v751
      %v753 = vpop.f32.mrf.mxu0
      %v754 = vadd.f32 %v705, %v753
      %755 = vmatmul.bf16.gmra.mxu0 %v542
      %v756 = vpop.f32.mrf.mxu0
      %v757 = vadd.f32 %v708, %v756
      %v758 = vpop.f32.mrf.mxu0
      %v759 = vadd.f32 %v710, %v758
      %760 = vmatmul.bf16.gmra.mxu0 %v544
      %v761 = vpop.f32.mrf.mxu0
      %v762 = vadd.f32 %v713, %v761
      %v763 = vpop.f32.mrf.mxu0
      %v764 = vadd.f32 %v715, %v763
      %765 = vmatmul.bf16.gmra.mxu0 %v546
      %v766 = vpop.f32.mrf.mxu0
      %v767 = vadd.f32 %v718, %v766
      %v768 = vpop.f32.mrf.mxu0
      %v769 = vadd.f32 %v720, %v768
      %770 = vmatmul.bf16.gmra.mxu0 %v548
      %v771 = vpop.f32.mrf.mxu0
      %v772 = vadd.f32 %v723, %v771
      %v773 = vpop.f32.mrf.mxu0
      %v774 = vadd.f32 %v725, %v773
      %775 = vmatmul.bf16.gmra.mxu0 %v550
      %v776 = vpop.f32.mrf.mxu0
      %v777 = vadd.f32 %v728, %v776
      %v778 = vpop.f32.mrf.mxu0
      %v779 = vadd.f32 %v730, %v778
      %780 = vdwg.mxu0
      %v781 = vmax.f32 %v742, 0.0
      %v782 = vmax.f32 %v744, 0.0
      %v783 = vmax.f32 %v747, 0.0
      %v784 = vmax.f32 %v749, 0.0
      %v785 = vmax.f32 %v752, 0.0
      %v786 = vmax.f32 %v754, 0.0
      %v787 = vmax.f32 %v757, 0.0
      %v788 = vmax.f32 %v759, 0.0
      %v789 = vmax.f32 %v762, 0.0
      %v790 = vmax.f32 %v764, 0.0
      %v791 = vmax.f32 %v767, 0.0
      %v792 = vmax.f32 %v769, 0.0
      %v793 = vmax.f32 %v772, 0.0
      %v794 = vmax.f32 %v774, 0.0
      %v795 = vmax.f32 %v777, 0.0
      %v796 = vmax.f32 %v779, 0.0
      %v797 = vpack.c.bf16 %v782, %v781
      %v798 = vpack.c.bf16 %v784, %v783
      %v799 = vpack.c.bf16 %v786, %v785
      %v800 = vpack.c.bf16 %v788, %v787
      %v801 = vpack.c.bf16 %v790, %v789
      %v802 = vpack.c.bf16 %v792, %v791
      %v803 = vpack.c.bf16 %v794, %v793
      %v804 = vpack.c.bf16 %v796, %v795
      %v805 = vld [vmem:[%s5] sm:$0xf]
      %v806 = vld [vmem:[%s5 + $0x4] sm:$0xf]
      %v807 = vld [vmem:[%s5 + $0x8] sm:$0xf]
      %v808 = vld [vmem:[%s5 + $0xc] sm:$0xf]
      %v809 = vld [vmem:[%s5 + $0x10] sm:$0xf]
      %v810 = vld [vmem:[%s5 + $0x14] sm:$0xf]
      %v811 = vld [vmem:[%s5 + $0x18] sm:$0xf]
      %v812 = vld [vmem:[%s5 + $0x1c] sm:$0xf]
      %v813 = vld [vmem:[%s5 + $0x20] sm:$0xf]
      %v814 = vld [vmem:[%s5 + $0x24] sm:$0xf]
      %v815 = vld [vmem:[%s5 + $0x28] sm:$0xf]
      %v816 = vld [vmem:[%s5 + $0x2c] sm:$0xf]
      %v817 = vld [vmem:[%s5 + $0x30] sm:$0xf]
      %v818 = vld [vmem:[%s5 + $0x34] sm:$0xf]
      %v819 = vld [vmem:[%s5 + $0x38] sm:$0xf]
      %v820 = vld [vmem:[%s5 + $0x3c] sm:$0xf]
      %v821 = vld [vmem:[%s6] sm:$0x1]
      %v823 = vperm.slane %v821, 0
      %v841 = vunpack.c.l.b16 %v805
      %v842 = vunpack.c.l.b16 %v806
      %v843 = vunpack.c.l.b16 %v807
      %v844 = vunpack.c.l.b16 %v808
      %v845 = vunpack.c.l.b16 %v809
      %v846 = vunpack.c.l.b16 %v810
      %v847 = vunpack.c.l.b16 %v811
      %v848 = vunpack.c.l.b16 %v812
      %v849 = vunpack.c.l.b16 %v813
      %v850 = vunpack.c.l.b16 %v814
      %v851 = vunpack.c.l.b16 %v815
      %v852 = vunpack.c.l.b16 %v816
      %v853 = vunpack.c.l.b16 %v817
      %v854 = vunpack.c.l.b16 %v818
      %v855 = vunpack.c.l.b16 %v819
      %v856 = vunpack.c.l.b16 %v820
      %v857 = vpack.c.b16 %v842, %v841
      %v858 = vpack.c.b16 %v844, %v843
      %v859 = vpack.c.b16 %v846, %v845
      %v860 = vpack.c.b16 %v848, %v847
      %v861 = vpack.c.b16 %v850, %v849
      %v862 = vpack.c.b16 %v852, %v851
      %v863 = vpack.c.b16 %v854, %v853
      %v864 = vpack.c.b16 %v856, %v855
      %873 = vmatpush.bf16.msra.mxu0 %v864
      %874 = vmatpush.bf16.msra.mxu0 %v863
      %875 = vmatpush.bf16.msra.mxu0 %v862
      %876 = vmatpush.bf16.msra.mxu0 %v861
      %877 = vmatpush.bf16.msra.mxu0 %v860
      %878 = vmatpush.bf16.msra.mxu0 %v859
      %879 = vmatpush.bf16.msra.mxu0 %v858
      %880 = vmatpush.bf16.msra.mxu0 %v857
      %881 = vmatmul.bf16.gmra.mxu0 %v797
      %v882 = vpop.f32.mrf.mxu0
      %v883 = vadd.f32 %v823, %v882
      %v884 = vpop.f32.mrf.mxu0
      %v885 = vadd.f32 %v823, %v884
      %886 = vmatmul.bf16.gmra.mxu0 %v798
      %v887 = vpop.f32.mrf.mxu0
      %v888 = vadd.f32 %v823, %v887
      %v889 = vpop.f32.mrf.mxu0
      %v890 = vadd.f32 %v823, %v889
      %891 = vmatmul.bf16.gmra.mxu0 %v799
      %v892 = vpop.f32.mrf.mxu0
      %v893 = vadd.f32 %v823, %v892
      %v894 = vpop.f32.mrf.mxu0
      %v895 = vadd.f32 %v823, %v894
      %896 = vmatmul.bf16.gmra.mxu0 %v800
      %v897 = vpop.f32.mrf.mxu0
      %v898 = vadd.f32 %v823, %v897
      %v899 = vpop.f32.mrf.mxu0
      %v900 = vadd.f32 %v823, %v899
      %901 = vmatmul.bf16.gmra.mxu0 %v801
      %v902 = vpop.f32.mrf.mxu0
      %v903 = vadd.f32 %v823, %v902
      %v904 = vpop.f32.mrf.mxu0
      %v905 = vadd.f32 %v823, %v904
      %906 = vmatmul.bf16.gmra.mxu0 %v802
      %v907 = vpop.f32.mrf.mxu0
      %v908 = vadd.f32 %v823, %v907
      %v909 = vpop.f32.mrf.mxu0
      %v910 = vadd.f32 %v823, %v909
      %911 = vmatmul.bf16.gmra.mxu0 %v803
      %v912 = vpop.f32.mrf.mxu0
      %v913 = vadd.f32 %v823, %v912
      %v914 = vpop.f32.mrf.mxu0
      %v915 = vadd.f32 %v823, %v914
      %916 = vmatmul.bf16.gmra.mxu0 %v804
      %v917 = vpop.f32.mrf.mxu0
      %v918 = vadd.f32 %v823, %v917
      %v919 = vpop.f32.mrf.mxu0
      %v920 = vadd.f32 %v823, %v919
      %921 = vdwg.mxu0
      %v922 = vmax.f32 %v883, 0.0
      %v923 = vmax.f32 %v885, 0.0
      %v924 = vmax.f32 %v888, 0.0
      %v925 = vmax.f32 %v890, 0.0
      %v926 = vmax.f32 %v893, 0.0
      %v927 = vmax.f32 %v895, 0.0
      %v928 = vmax.f32 %v898, 0.0
      %v929 = vmax.f32 %v900, 0.0
      %v930 = vmax.f32 %v903, 0.0
      %v931 = vmax.f32 %v905, 0.0
      %v932 = vmax.f32 %v908, 0.0
      %v933 = vmax.f32 %v910, 0.0
      %v934 = vmax.f32 %v913, 0.0
      %v935 = vmax.f32 %v915, 0.0
      %v936 = vmax.f32 %v918, 0.0
      %v937 = vmax.f32 %v920, 0.0
      %v938 = vpack.c.bf16 %v923, %v922
      %v939 = vpack.c.bf16 %v925, %v924
      %v940 = vpack.c.bf16 %v927, %v926
      %v941 = vpack.c.bf16 %v929, %v928
      %v942 = vpack.c.bf16 %v931, %v930
      %v943 = vpack.c.bf16 %v933, %v932
      %v944 = vpack.c.bf16 %v935, %v934
      %v945 = vpack.c.bf16 %v937, %v936
      %v946 = vld [vmem:[%s7] sm:$0xf]
      %v947 = vld [vmem:[%s7 + $0x4] sm:$0xf]
      %v948 = vld [vmem:[%s8] sm:$0x1]
      %v950 = vperm.slane %v948, 0
      %v954 = vunpack.c.l.b16 %v946
      %v955 = vunpack.c.l.b16 %v947
      %v956 = vpack.c.b16 %v955, %v954
      %vm958 = vcmask 130048
      %v960 = vsel %vm958, %v938, 0
      %v963 = vsel %vm958, %v939, 0
      %v966 = vsel %vm958, %v940, 0
      %v969 = vsel %vm958, %v941, 0
      %v972 = vsel %vm958, %v942, 0
      %v975 = vsel %vm958, %v943, 0
      %v978 = vsel %vm958, %v944, 0
      %v981 = vsel %vm958, %v945, 0
      %983 = vmatpush.bf16.msra.mxu0 0
      %984 = vmatpush.bf16.msra.mxu0 0
      %985 = vmatpush.bf16.msra.mxu0 0
      %986 = vmatpush.bf16.msra.mxu0 0
      %987 = vmatpush.bf16.msra.mxu0 0
      %988 = vmatpush.bf16.msra.mxu0 0
      %989 = vmatpush.bf16.msra.mxu0 0
      %990 = vmatpush.bf16.msra.mxu0 %v956
      %991 = vmatmul.bf16.gmra.mxu0 %v960
      %v992 = vpop.f32.mrf.mxu0
      %v993 = vadd.f32 %v950, %v992
      %v994 = vpop.f32.mrf.mxu0
      %v995 = vadd.f32 %v950, %v994
      %996 = vmatmul.bf16.gmra.mxu0 %v963
      %v997 = vpop.f32.mrf.mxu0
      %v998 = vadd.f32 %v950, %v997
      %v999 = vpop.f32.mrf.mxu0
      %v1000 = vadd.f32 %v950, %v999
      %1001 = vmatmul.bf16.gmra.mxu0 %v966
      %v1002 = vpop.f32.mrf.mxu0
      %v1003 = vadd.f32 %v950, %v1002
      %v1004 = vpop.f32.mrf.mxu0
      %v1005 = vadd.f32 %v950, %v1004
      %1006 = vmatmul.bf16.gmra.mxu0 %v969
      %v1007 = vpop.f32.mrf.mxu0
      %v1008 = vadd.f32 %v950, %v1007
      %v1009 = vpop.f32.mrf.mxu0
      %v1010 = vadd.f32 %v950, %v1009
      %1011 = vmatmul.bf16.gmra.mxu0 %v972
      %v1012 = vpop.f32.mrf.mxu0
      %v1013 = vadd.f32 %v950, %v1012
      %v1014 = vpop.f32.mrf.mxu0
      %v1015 = vadd.f32 %v950, %v1014
      %1016 = vmatmul.bf16.gmra.mxu0 %v975
      %v1017 = vpop.f32.mrf.mxu0
      %v1018 = vadd.f32 %v950, %v1017
      %v1019 = vpop.f32.mrf.mxu0
      %v1020 = vadd.f32 %v950, %v1019
      %1021 = vmatmul.bf16.gmra.mxu0 %v978
      %v1022 = vpop.f32.mrf.mxu0
      %v1023 = vadd.f32 %v950, %v1022
      %v1024 = vpop.f32.mrf.mxu0
      %v1025 = vadd.f32 %v950, %v1024
      %1026 = vmatmul.bf16.gmra.mxu0 %v981
      %v1027 = vpop.f32.mrf.mxu0
      %v1028 = vadd.f32 %v950, %v1027
      %v1029 = vpop.f32.mrf.mxu0
      %v1030 = vadd.f32 %v950, %v1029
      %1031 = vdwg.mxu0
      %vm1032 = vcmask 23552
      %1033 = vst.msk [vmem:[%s334] sm:$0xff] %vm1032, %v993
      %1034 = vst.msk [vmem:[%s334 + $0x8] sm:$0xff] %vm1032, %v995
      %1035 = vst.msk [vmem:[%s334 + $0x10] sm:$0xff] %vm1032, %v998
      %1036 = vst.msk [vmem:[%s334 + $0x18] sm:$0xff] %vm1032, %v1000
      %1037 = vst.msk [vmem:[%s334 + $0x20] sm:$0xff] %vm1032, %v1003
      %1038 = vst.msk [vmem:[%s334 + $0x28] sm:$0xff] %vm1032, %v1005
      %1039 = vst.msk [vmem:[%s334 + $0x30] sm:$0xff] %vm1032, %v1008
      %1040 = vst.msk [vmem:[%s334 + $0x38] sm:$0xff] %vm1032, %v1010
      %1041 = vst.msk [vmem:[%s334 + $0x40] sm:$0xff] %vm1032, %v1013
      %1042 = vst.msk [vmem:[%s334 + $0x48] sm:$0xff] %vm1032, %v1015
      %1043 = vst.msk [vmem:[%s334 + $0x50] sm:$0xff] %vm1032, %v1018
      %1044 = vst.msk [vmem:[%s334 + $0x58] sm:$0xff] %vm1032, %v1020
      %1045 = vst.msk [vmem:[%s334 + $0x60] sm:$0xff] %vm1032, %v1023
      %1046 = vst.msk [vmem:[%s334 + $0x68] sm:$0xff] %vm1032, %v1025
      %1047 = vst.msk [vmem:[%s334 + $0x70] sm:$0xff] %vm1032, %v1028
      %1048 = vst.msk [vmem:[%s334 + $0x78] sm:$0xff] %vm1032, %v1030
      %s1049 = smul.u32 16, %s20
      %p1050 = scmp.lt.s32.totalorder %s1049, 31
      %s1051 = scalar_select %p1050, %s1049, 31
      %s1052 = smul.addr %s1051, 8
      %s1053 = scalar_lea.vmem %s9, %s1052
      // Predicated region
      $region57: #{mlp_forward.1} parent=55 // pred_check
        %p1054 = pneg %p232
      $region58: #{mlp_forward.1} parent=55 // pred_check_branch
        %1056 = sbr.rel (%p1054) target = $region60
      $region59: #{mlp_forward.1} parent=55 // pred_region
        %s1057 = smul.u32 16, %s20
      $region60: #{mlp_forward.1} parent=55 // pred_fallthru
        _
    $region56: #{mlp_forward.1} parent=5 // pred_fallthru
      _
    %p1058 = scmp.le.s32.totalorder 2, %s15
    // Predicated region
    $region61: #{mlp_forward.1} parent=5 // pred_check
      %p1059 = pneg %p1058
    $region62: #{mlp_forward.1} parent=5 // pred_check_branch
      %1061 = sbr.rel (%p1059) target = $region64
    $region63: #{mlp_forward.1} parent=5 // pred_region
      %s1062 = ssub.s32 %s15, 2
      // Predicated region
      $region65: #{mlp_forward.1} parent=63 // pred_check
        %p1063 = pneg %p238
      $region66: #{mlp_forward.1} parent=63 // pred_check_branch
        %1065 = sbr.rel (%p1063) target = $region68
      $region67: #{mlp_forward.1} parent=63 // pred_region
        %s1066 = smul.u32 16, %s21
        %p1067 = scmp.lt.s32.totalorder %s1066, 31
        %s1068 = scalar_select %p1067, %s1066, 31
        %s1069 = smul.addr %s1068, 8
        %s1070 = scalar_lea.vmem %s9, %s1069
      $region68: #{mlp_forward.1} parent=63 // pred_fallthru
        _
    $region64: #{mlp_forward.1} parent=5 // pred_fallthru
      _
  $region6: #{mlp_forward.1} parent=0 // loop_footer
    %s19 = sadd.s32 1, %s15
  $region7: #{mlp_forward.1} parent=0 // loop_footer_branch
    %14 = sbr.rel target = $region3
  $region8: #{mlp_forward.1} parent=0 // loop_exit
    _

</llo_original>
